<compile_context>
chip_gen: v6e
topology: v6e:2x2x1
jax: 0.10.0
libtpu: 0.0.40
codegen_flags: <defaults>
</compile_context>

<pallas_src>
import jax
import jax.numpy as jnp
from jax import lax
from jax.experimental import pallas as pl
from jax.experimental.pallas import tpu as pltpu


def _fused_conv_unshuffle_kernel(xs_ref, w_ref, o_ref, p_ref):
    # xs_ref: (1, 4, RH+1, WH+1, Cin)  parity-split padded input slab,
    #         axis 1 index = pi*2 + pj (row parity, col parity)
    # w_ref : (16*Cin, 4*Cout)         zero-embedded 4x4/stride-2 weight
    # o_ref : (1, RH, WH, 4*Cout)      pixel-unshuffled output tile (NHWC-ish)
    # p_ref : (RH, WH, 16*Cin)         im2col scratch in VMEM
    rh = o_ref.shape[1]
    wh = o_ref.shape[2]
    cin = xs_ref.shape[4]

    # Build the im2col buffer: 16 contiguous-slice copies (tap = dy*4 + dx).
    for dy in range(4):
        pi, r0 = dy % 2, dy // 2
        for dx in range(4):
            pj, s0 = dx % 2, dx // 2
            tap = dy * 4 + dx
            p_ref[:, :, tap * cin:(tap + 1) * cin] = (
                xs_ref[0, pi * 2 + pj, r0:r0 + rh, s0:s0 + wh, :])

    # Single deep contraction on the MXU (depth 16*Cin, 4*Cout output lanes).
    p = p_ref[...].reshape(rh * wh, 16 * cin)
    y = jnp.dot(p, w_ref[...], preferred_element_type=jnp.float32)
    o_ref[0, :, :, :] = y.reshape(rh, wh, o_ref.shape[3]).astype(o_ref.dtype)


def _pick_row_tile(h_out, wo, cin, cout, itemsize, budget_bytes):
    """Largest divisor of h_out whose per-step VMEM estimate fits the budget."""
    w_bytes = 2 * (16 * cin) * (4 * cout) * itemsize          # weight (x2 buf)
    best = 1
    for rh in range(1, h_out + 1):
        if h_out % rh:
            continue
        est = (2 * 4 * (rh + 1) * (wo + 1) * cin              # input slab (x2 buf)
               + rh * wo * 16 * cin                           # im2col scratch
               + 2 * rh * wo * 4 * cout) * itemsize + w_bytes  # output (x2 buf)
        if est <= budget_bytes:
            best = rh
    return best


def downsample_forward(x_nchw, weight_oihw, *, vmem_budget_bytes=20 * 1024 * 1024):
    """Forward pass of Downsample.

    x_nchw:      (N, C, H, W)     float32
    weight_oihw: (C//2, C, 3, 3)  float32 (PyTorch Conv2d weight layout)
    returns:     (N, 2*C, H//2, W//2) -- matches Conv2d + PixelUnshuffle(2)
    """
    N, Cin, H, W = x_nchw.shape
    Cout = weight_oihw.shape[0]
    assert Cout == Cin // 2
    assert H % 2 == 0 and W % 2 == 0
    Ho, Wo = H // 2, W // 2
    dt = x_nchw.dtype
    itemsize = jnp.dtype(dt).itemsize

    rh = _pick_row_tile(Ho, Wo, Cin, Cout, itemsize, vmem_budget_bytes)
    nT = Ho // rh

    # ---- input prep (single XLA gather pass): pad, parity-split, halo row
    # slabs, NCHW -> channels-last.
    #   xs[n*nT + t, pi*2 + pj, r, s, c] = xpad[n, c, t*2*rh + 2r + pi, 2s + pj]
    xpad = jnp.pad(x_nchw, ((0, 0), (0, 0), (1, 1), (1, 1)))
    row_idx = (jnp.arange(nT)[:, None, None] * (2 * rh)
               + jnp.arange(2)[None, :, None]
               + 2 * jnp.arange(rh + 1)[None, None, :])            # (nT, 2, rh+1)
    col_idx = jnp.arange(2)[:, None] + 2 * jnp.arange(Wo + 1)[None, :]  # (2, Wo+1)
    t1 = xpad[:, :, row_idx, :]                  # (N, Cin, nT, 2, rh+1, W+2)
    t2 = t1[..., col_idx]                        # (N, Cin, nT, 2, rh+1, 2, Wo+1)
    xs = jnp.transpose(t2, (0, 2, 3, 5, 4, 6, 1))  # (N, nT, pi, pj, r, s, Cin)
    xs = xs.reshape(N * nT, 4, rh + 1, Wo + 1, Cin)

    # ---- weight prep: embed the 3x3 kernel into the equivalent 4x4/stride-2
    # weight, flattened to (16*Cin, 4*Cout); column order c*4 + i*2 + j matches
    # PixelUnshuffle's channel order exactly.
    w_k = jnp.transpose(weight_oihw, (2, 3, 1, 0))          # (ky, kx, Cin, Cout)
    wbig = jnp.zeros((4, 4, Cin, Cout, 2, 2), weight_oihw.dtype)
    for i in range(2):
        for j in range(2):
            wbig = wbig.at[i:i + 3, j:j + 3, :, :, i, j].set(w_k)
    wmat = wbig.reshape(16 * Cin, 4 * Cout)

    y_nhwc = pl.pallas_call(
        _fused_conv_unshuffle_kernel,
        out_shape=jax.ShapeDtypeStruct((N, Ho, Wo, 4 * Cout), dt),
        grid_spec=pltpu.PrefetchScalarGridSpec(
            num_scalar_prefetch=0,
            grid=(N, nT),
            in_specs=[
                pl.BlockSpec((1, 4, rh + 1, Wo + 1, Cin),
                             lambda n, t: (n * nT + t, 0, 0, 0, 0)),
                pl.BlockSpec((16 * Cin, 4 * Cout), lambda n, t: (0, 0)),
            ],
            out_specs=pl.BlockSpec((1, rh, Wo, 4 * Cout),
                                   lambda n, t: (n, t, 0, 0)),
            scratch_shapes=[pltpu.VMEM((rh, Wo, 16 * Cin), dt)],
        ),
        compiler_params=pltpu.CompilerParams(
            dimension_semantics=("parallel", "parallel"),
            vmem_limit_bytes=48 * 1024 * 1024),
    )(xs, wmat)

    # Channel order already matches PixelUnshuffle; only a layout transpose
    # back to the PyTorch NCHW contract remains.
    return jnp.transpose(y_nhwc, (0, 3, 1, 2))


def _reference_forward(x_nchw, weight_oihw):
    conv = lax.conv_general_dilated(
        x_nchw, weight_oihw, window_strides=(1, 1), padding="SAME",
        dimension_numbers=("NCHW", "OIHW", "NCHW"))
    N, Cout, H, W = conv.shape
    y = conv.reshape(N, Cout, H // 2, 2, W // 2, 2)            # (n, c, h, i, w, j)
    y = jnp.transpose(y, (0, 1, 3, 5, 2, 4))                   # (n, c, i, j, h, w)
    return y.reshape(N, Cout * 4, H // 2, W // 2)


if __name__ == "__main__":
    key = jax.random.PRNGKey(0)
    kx, kw = jax.random.split(key)

    N, C, H, W = 2, 8, 16, 16          # features = 8 -> conv out channels = 4
    x = jax.random.normal(kx, (N, C, H, W), dtype=jnp.float32)
    fan_in = C * 3 * 3
    bound = 1.0 / (fan_in ** 0.5)
    weight = jax.random.uniform(kw, (C // 2, C, 3, 3), dtype=jnp.float32,
                                minval=-bound, maxval=bound)

    out = jax.jit(downsample_forward)(x, weight)
    out = jax.block_until_ready(out)

    ref = _reference_forward(x, weight)
    assert out.shape == (N, 2 * C, H // 2, W // 2), out.shape
    assert jnp.allclose(out, ref, atol=1e-4, rtol=1e-4), \
        float(jnp.max(jnp.abs(out - ref)))

    print("KERNEL_OK")
</pallas_src>

<mosaic_0001>
module attributes {stable_mosaic.version = 11 : i64} {
  func.func @_fused_conv_unshuffle_kernel(%arg0: i32, %arg1: i32, %arg2: memref<1x4x9x9x8xf32, #tpu.memory_space<vmem>>, %arg3: memref<128x16xf32, #tpu.memory_space<vmem>>, %arg4: memref<1x8x8x16xf32, #tpu.memory_space<vmem>>, %arg5: memref<8x8x128xf32, #tpu.memory_space<vmem>>) attributes {dimension_semantics = [#tpu.dimension_semantics<parallel>, #tpu.dimension_semantics<parallel>], iteration_bounds = array<i64: 2, 1>, scalar_prefetch = 0 : i64, scratch_operands = 1 : i64, tpu.core_type = #tpu.core_type<tc>, window_params = [{transform_indices = @transform_0, window_bounds = array<i64: 1, 4, 9, 9, 8>}, {pipeline_mode = #tpu.pipeline_mode<synchronous>, transform_indices = @transform_1, window_bounds = array<i64: 128, 16>}, {transform_indices = @transform_2, window_bounds = array<i64: 1, 8, 8, 16>}]} {
    %c0 = arith.constant 0 : index
    %c0_0 = arith.constant 0 : index
    %c0_1 = arith.constant 0 : index
    %c0_2 = arith.constant 0 : index
    %c0_3 = arith.constant 0 : index
    %0 = vector.load %arg2[%c0, %c0_0, %c0_1, %c0_2, %c0_3] : memref<1x4x9x9x8xf32, #tpu.memory_space<vmem>>, vector<1x1x8x8x8xf32>
    %1 = vector.shape_cast %0 : vector<1x1x8x8x8xf32> to vector<8x8x8xf32>
    %c0_4 = arith.constant 0 : index
    %c0_5 = arith.constant 0 : index
    %c0_6 = arith.constant 0 : index
    %2 = vector.load %arg5[%c0_4, %c0_5, %c0_6] : memref<8x8x128xf32, #tpu.memory_space<vmem>>, vector<8x8x8xf32>
    tpu.vector_store %arg5[%c0_4, %c0_5, %c0_6], %1 {strides = array<i32>} : memref<8x8x128xf32, #tpu.memory_space<vmem>>, vector<8x8x8xf32>,
    %c0_7 = arith.constant 0 : index
    %c1 = arith.constant 1 : index
    %c0_8 = arith.constant 0 : index
    %c0_9 = arith.constant 0 : index
    %c0_10 = arith.constant 0 : index
    %3 = vector.load %arg2[%c0_7, %c1, %c0_8, %c0_9, %c0_10] : memref<1x4x9x9x8xf32, #tpu.memory_space<vmem>>, vector<1x1x8x8x8xf32>
    %4 = vector.shape_cast %3 : vector<1x1x8x8x8xf32> to vector<8x8x8xf32>
    %c0_11 = arith.constant 0 : index
    %c0_12 = arith.constant 0 : index
    %c8 = arith.constant 8 : index
    %5 = vector.load %arg5[%c0_11, %c0_12, %c8] : memref<8x8x128xf32, #tpu.memory_space<vmem>>, vector<8x8x8xf32>
    tpu.vector_store %arg5[%c0_11, %c0_12, %c8], %4 {strides = array<i32>} : memref<8x8x128xf32, #tpu.memory_space<vmem>>, vector<8x8x8xf32>,
    %c0_13 = arith.constant 0 : index
    %c0_14 = arith.constant 0 : index
    %c0_15 = arith.constant 0 : index
    %c1_16 = arith.constant 1 : index
    %c0_17 = arith.constant 0 : index
    %6 = vector.load %arg2[%c0_13, %c0_14, %c0_15, %c1_16, %c0_17] : memref<1x4x9x9x8xf32, #tpu.memory_space<vmem>>, vector<1x1x8x8x8xf32>
    %7 = vector.shape_cast %6 : vector<1x1x8x8x8xf32> to vector<8x8x8xf32>
    %c0_18 = arith.constant 0 : index
    %c0_19 = arith.constant 0 : index
    %c16 = arith.constant 16 : index
    %8 = vector.load %arg5[%c0_18, %c0_19, %c16] : memref<8x8x128xf32, #tpu.memory_space<vmem>>, vector<8x8x8xf32>
    tpu.vector_store %arg5[%c0_18, %c0_19, %c16], %7 {strides = array<i32>} : memref<8x8x128xf32, #tpu.memory_space<vmem>>, vector<8x8x8xf32>,
    %c0_20 = arith.constant 0 : index
    %c1_21 = arith.constant 1 : index
    %c0_22 = arith.constant 0 : index
    %c1_23 = arith.constant 1 : index
    %c0_24 = arith.constant 0 : index
    %9 = vector.load %arg2[%c0_20, %c1_21, %c0_22, %c1_23, %c0_24] : memref<1x4x9x9x8xf32, #tpu.memory_space<vmem>>, vector<1x1x8x8x8xf32>
    %10 = vector.shape_cast %9 : vector<1x1x8x8x8xf32> to vector<8x8x8xf32>
    %c0_25 = arith.constant 0 : index
    %c0_26 = arith.constant 0 : index
    %c24 = arith.constant 24 : index
    %11 = vector.load %arg5[%c0_25, %c0_26, %c24] : memref<8x8x128xf32, #tpu.memory_space<vmem>>, vector<8x8x8xf32>
    tpu.vector_store %arg5[%c0_25, %c0_26, %c24], %10 {strides = array<i32>} : memref<8x8x128xf32, #tpu.memory_space<vmem>>, vector<8x8x8xf32>,
    %c0_27 = arith.constant 0 : index
    %c2 = arith.constant 2 : index
    %c0_28 = arith.constant 0 : index
    %c0_29 = arith.constant 0 : index
    %c0_30 = arith.constant 0 : index
    %12 = vector.load %arg2[%c0_27, %c2, %c0_28, %c0_29, %c0_30] : memref<1x4x9x9x8xf32, #tpu.memory_space<vmem>>, vector<1x1x8x8x8xf32>
    %13 = vector.shape_cast %12 : vector<1x1x8x8x8xf32> to vector<8x8x8xf32>
    %c0_31 = arith.constant 0 : index
    %c0_32 = arith.constant 0 : index
    %c32 = arith.constant 32 : index
    %14 = vector.load %arg5[%c0_31, %c0_32, %c32] : memref<8x8x128xf32, #tpu.memory_space<vmem>>, vector<8x8x8xf32>
    tpu.vector_store %arg5[%c0_31, %c0_32, %c32], %13 {strides = array<i32>} : memref<8x8x128xf32, #tpu.memory_space<vmem>>, vector<8x8x8xf32>,
    %c0_33 = arith.constant 0 : index
    %c3 = arith.constant 3 : index
    %c0_34 = arith.constant 0 : index
    %c0_35 = arith.constant 0 : index
    %c0_36 = arith.constant 0 : index
    %15 = vector.load %arg2[%c0_33, %c3, %c0_34, %c0_35, %c0_36] : memref<1x4x9x9x8xf32, #tpu.memory_space<vmem>>, vector<1x1x8x8x8xf32>
    %16 = vector.shape_cast %15 : vector<1x1x8x8x8xf32> to vector<8x8x8xf32>
    %c0_37 = arith.constant 0 : index
    %c0_38 = arith.constant 0 : index
    %c40 = arith.constant 40 : index
    %17 = vector.load %arg5[%c0_37, %c0_38, %c40] : memref<8x8x128xf32, #tpu.memory_space<vmem>>, vector<8x8x8xf32>
    tpu.vector_store %arg5[%c0_37, %c0_38, %c40], %16 {strides = array<i32>} : memref<8x8x128xf32, #tpu.memory_space<vmem>>, vector<8x8x8xf32>,
    %c0_39 = arith.constant 0 : index
    %c2_40 = arith.constant 2 : index
    %c0_41 = arith.constant 0 : index
    %c1_42 = arith.constant 1 : index
    %c0_43 = arith.constant 0 : index
    %18 = vector.load %arg2[%c0_39, %c2_40, %c0_41, %c1_42, %c0_43] : memref<1x4x9x9x8xf32, #tpu.memory_space<vmem>>, vector<1x1x8x8x8xf32>
    %19 = vector.shape_cast %18 : vector<1x1x8x8x8xf32> to vector<8x8x8xf32>
    %c0_44 = arith.constant 0 : index
    %c0_45 = arith.constant 0 : index
    %c48 = arith.constant 48 : index
    %20 = vector.load %arg5[%c0_44, %c0_45, %c48] : memref<8x8x128xf32, #tpu.memory_space<vmem>>, vector<8x8x8xf32>
    tpu.vector_store %arg5[%c0_44, %c0_45, %c48], %19 {strides = array<i32>} : memref<8x8x128xf32, #tpu.memory_space<vmem>>, vector<8x8x8xf32>,
    %c0_46 = arith.constant 0 : index
    %c3_47 = arith.constant 3 : index
    %c0_48 = arith.constant 0 : index
    %c1_49 = arith.constant 1 : index
    %c0_50 = arith.constant 0 : index
    %21 = vector.load %arg2[%c0_46, %c3_47, %c0_48, %c1_49, %c0_50] : memref<1x4x9x9x8xf32, #tpu.memory_space<vmem>>, vector<1x1x8x8x8xf32>
    %22 = vector.shape_cast %21 : vector<1x1x8x8x8xf32> to vector<8x8x8xf32>
    %c0_51 = arith.constant 0 : index
    %c0_52 = arith.constant 0 : index
    %c56 = arith.constant 56 : index
    %23 = vector.load %arg5[%c0_51, %c0_52, %c56] : memref<8x8x128xf32, #tpu.memory_space<vmem>>, vector<8x8x8xf32>
    tpu.vector_store %arg5[%c0_51, %c0_52, %c56], %22 {strides = array<i32>} : memref<8x8x128xf32, #tpu.memory_space<vmem>>, vector<8x8x8xf32>,
    %c0_53 = arith.constant 0 : index
    %c0_54 = arith.constant 0 : index
    %c1_55 = arith.constant 1 : index
    %c0_56 = arith.constant 0 : index
    %c0_57 = arith.constant 0 : index
    %24 = vector.load %arg2[%c0_53, %c0_54, %c1_55, %c0_56, %c0_57] : memref<1x4x9x9x8xf32, #tpu.memory_space<vmem>>, vector<1x1x8x8x8xf32>
    %25 = vector.shape_cast %24 : vector<1x1x8x8x8xf32> to vector<8x8x8xf32>
    %c0_58 = arith.constant 0 : index
    %c0_59 = arith.constant 0 : index
    %c64 = arith.constant 64 : index
    %26 = vector.load %arg5[%c0_58, %c0_59, %c64] : memref<8x8x128xf32, #tpu.memory_space<vmem>>, vector<8x8x8xf32>
    tpu.vector_store %arg5[%c0_58, %c0_59, %c64], %25 {strides = array<i32>} : memref<8x8x128xf32, #tpu.memory_space<vmem>>, vector<8x8x8xf32>,
    %c0_60 = arith.constant 0 : index
    %c1_61 = arith.constant 1 : index
    %c1_62 = arith.constant 1 : index
    %c0_63 = arith.constant 0 : index
    %c0_64 = arith.constant 0 : index
    %27 = vector.load %arg2[%c0_60, %c1_61, %c1_62, %c0_63, %c0_64] : memref<1x4x9x9x8xf32, #tpu.memory_space<vmem>>, vector<1x1x8x8x8xf32>
    %28 = vector.shape_cast %27 : vector<1x1x8x8x8xf32> to vector<8x8x8xf32>
    %c0_65 = arith.constant 0 : index
    %c0_66 = arith.constant 0 : index
    %c72 = arith.constant 72 : index
    %29 = vector.load %arg5[%c0_65, %c0_66, %c72] : memref<8x8x128xf32, #tpu.memory_space<vmem>>, vector<8x8x8xf32>
    tpu.vector_store %arg5[%c0_65, %c0_66, %c72], %28 {strides = array<i32>} : memref<8x8x128xf32, #tpu.memory_space<vmem>>, vector<8x8x8xf32>,
    %c0_67 = arith.constant 0 : index
    %c0_68 = arith.constant 0 : index
    %c1_69 = arith.constant 1 : index
    %c1_70 = arith.constant 1 : index
    %c0_71 = arith.constant 0 : index
    %30 = vector.load %arg2[%c0_67, %c0_68, %c1_69, %c1_70, %c0_71] : memref<1x4x9x9x8xf32, #tpu.memory_space<vmem>>, vector<1x1x8x8x8xf32>
    %31 = vector.shape_cast %30 : vector<1x1x8x8x8xf32> to vector<8x8x8xf32>
    %c0_72 = arith.constant 0 : index
    %c0_73 = arith.constant 0 : index
    %c80 = arith.constant 80 : index
    %32 = vector.load %arg5[%c0_72, %c0_73, %c80] : memref<8x8x128xf32, #tpu.memory_space<vmem>>, vector<8x8x8xf32>
    tpu.vector_store %arg5[%c0_72, %c0_73, %c80], %31 {strides = array<i32>} : memref<8x8x128xf32, #tpu.memory_space<vmem>>, vector<8x8x8xf32>,
    %c0_74 = arith.constant 0 : index
    %c1_75 = arith.constant 1 : index
    %c1_76 = arith.constant 1 : index
    %c1_77 = arith.constant 1 : index
    %c0_78 = arith.constant 0 : index
    %33 = vector.load %arg2[%c0_74, %c1_75, %c1_76, %c1_77, %c0_78] : memref<1x4x9x9x8xf32, #tpu.memory_space<vmem>>, vector<1x1x8x8x8xf32>
    %34 = vector.shape_cast %33 : vector<1x1x8x8x8xf32> to vector<8x8x8xf32>
    %c0_79 = arith.constant 0 : index
    %c0_80 = arith.constant 0 : index
    %c88 = arith.constant 88 : index
    %35 = vector.load %arg5[%c0_79, %c0_80, %c88] : memref<8x8x128xf32, #tpu.memory_space<vmem>>, vector<8x8x8xf32>
    tpu.vector_store %arg5[%c0_79, %c0_80, %c88], %34 {strides = array<i32>} : memref<8x8x128xf32, #tpu.memory_space<vmem>>, vector<8x8x8xf32>,
    %c0_81 = arith.constant 0 : index
    %c2_82 = arith.constant 2 : index
    %c1_83 = arith.constant 1 : index
    %c0_84 = arith.constant 0 : index
    %c0_85 = arith.constant 0 : index
    %36 = vector.load %arg2[%c0_81, %c2_82, %c1_83, %c0_84, %c0_85] : memref<1x4x9x9x8xf32, #tpu.memory_space<vmem>>, vector<1x1x8x8x8xf32>
    %37 = vector.shape_cast %36 : vector<1x1x8x8x8xf32> to vector<8x8x8xf32>
    %c0_86 = arith.constant 0 : index
    %c0_87 = arith.constant 0 : index
    %c96 = arith.constant 96 : index
    %38 = vector.load %arg5[%c0_86, %c0_87, %c96] : memref<8x8x128xf32, #tpu.memory_space<vmem>>, vector<8x8x8xf32>
    tpu.vector_store %arg5[%c0_86, %c0_87, %c96], %37 {strides = array<i32>} : memref<8x8x128xf32, #tpu.memory_space<vmem>>, vector<8x8x8xf32>,
    %c0_88 = arith.constant 0 : index
    %c3_89 = arith.constant 3 : index
    %c1_90 = arith.constant 1 : index
    %c0_91 = arith.constant 0 : index
    %c0_92 = arith.constant 0 : index
    %39 = vector.load %arg2[%c0_88, %c3_89, %c1_90, %c0_91, %c0_92] : memref<1x4x9x9x8xf32, #tpu.memory_space<vmem>>, vector<1x1x8x8x8xf32>
    %40 = vector.shape_cast %39 : vector<1x1x8x8x8xf32> to vector<8x8x8xf32>
    %c0_93 = arith.constant 0 : index
    %c0_94 = arith.constant 0 : index
    %c104 = arith.constant 104 : index
    %41 = vector.load %arg5[%c0_93, %c0_94, %c104] : memref<8x8x128xf32, #tpu.memory_space<vmem>>, vector<8x8x8xf32>
    tpu.vector_store %arg5[%c0_93, %c0_94, %c104], %40 {strides = array<i32>} : memref<8x8x128xf32, #tpu.memory_space<vmem>>, vector<8x8x8xf32>,
    %c0_95 = arith.constant 0 : index
    %c2_96 = arith.constant 2 : index
    %c1_97 = arith.constant 1 : index
    %c1_98 = arith.constant 1 : index
    %c0_99 = arith.constant 0 : index
    %42 = vector.load %arg2[%c0_95, %c2_96, %c1_97, %c1_98, %c0_99] : memref<1x4x9x9x8xf32, #tpu.memory_space<vmem>>, vector<1x1x8x8x8xf32>
    %43 = vector.shape_cast %42 : vector<1x1x8x8x8xf32> to vector<8x8x8xf32>
    %c0_100 = arith.constant 0 : index
    %c0_101 = arith.constant 0 : index
    %c112 = arith.constant 112 : index
    %44 = vector.load %arg5[%c0_100, %c0_101, %c112] : memref<8x8x128xf32, #tpu.memory_space<vmem>>, vector<8x8x8xf32>
    tpu.vector_store %arg5[%c0_100, %c0_101, %c112], %43 {strides = array<i32>} : memref<8x8x128xf32, #tpu.memory_space<vmem>>, vector<8x8x8xf32>,
    %c0_102 = arith.constant 0 : index
    %c3_103 = arith.constant 3 : index
    %c1_104 = arith.constant 1 : index
    %c1_105 = arith.constant 1 : index
    %c0_106 = arith.constant 0 : index
    %45 = vector.load %arg2[%c0_102, %c3_103, %c1_104, %c1_105, %c0_106] : memref<1x4x9x9x8xf32, #tpu.memory_space<vmem>>, vector<1x1x8x8x8xf32>
    %46 = vector.shape_cast %45 : vector<1x1x8x8x8xf32> to vector<8x8x8xf32>
    %c0_107 = arith.constant 0 : index
    %c0_108 = arith.constant 0 : index
    %c120 = arith.constant 120 : index
    %47 = vector.load %arg5[%c0_107, %c0_108, %c120] : memref<8x8x128xf32, #tpu.memory_space<vmem>>, vector<8x8x8xf32>
    tpu.vector_store %arg5[%c0_107, %c0_108, %c120], %46 {strides = array<i32>} : memref<8x8x128xf32, #tpu.memory_space<vmem>>, vector<8x8x8xf32>,
    %c0_109 = arith.constant 0 : index
    %c0_110 = arith.constant 0 : index
    %c0_111 = arith.constant 0 : index
    %48 = vector.load %arg5[%c0_109, %c0_110, %c0_111] : memref<8x8x128xf32, #tpu.memory_space<vmem>>, vector<8x8x128xf32>
    %49 = vector.shape_cast %48 : vector<8x8x128xf32> to vector<64x128xf32>
    %c0_112 = arith.constant 0 : index
    %c0_113 = arith.constant 0 : index
    %50 = vector.load %arg3[%c0_112, %c0_113] : memref<128x16xf32, #tpu.memory_space<vmem>>, vector<128x16xf32>
    %cst = arith.constant dense<0.000000e+00> : vector<64x16xf32>
    %51 = tpu.matmul %49, %50, %cst {dimension_numbers = #tpu.dot_dimension_numbers<[1], [0], [0], [1], [0, 0, 1, 1], [], []>} : vector<64x128xf32>, vector<128x16xf32>, vector<64x16xf32> -> vector<64x16xf32>
    %52 = vector.shape_cast %51 : vector<64x16xf32> to vector<8x8x16xf32>
    %c0_114 = arith.constant 0 : index
    %c0_115 = arith.constant 0 : index
    %c0_116 = arith.constant 0 : index
    %c0_117 = arith.constant 0 : index
    %53 = vector.load %arg4[%c0_114, %c0_115, %c0_116, %c0_117] : memref<1x8x8x16xf32, #tpu.memory_space<vmem>>, vector<1x8x8x16xf32>
    %54 = vector.shape_cast %53 : vector<1x8x8x16xf32> to vector<8x8x16xf32>
    %55 = vector.shape_cast %52 : vector<8x8x16xf32> to vector<1x8x8x16xf32>
    tpu.vector_store %arg4[%c0_114, %c0_115, %c0_116, %c0_117], %55 {strides = array<i32>} : memref<1x8x8x16xf32, #tpu.memory_space<vmem>>, vector<1x8x8x16xf32>,
    return
  }
  func.func @transform_0(%arg0: i32, %arg1: i32) -> (i32, i32, i32, i32, i32) {
    %c1_i32 = arith.constant 1 : i32
    %0 = arith.muli %arg0, %c1_i32 : i32
    %1 = arith.addi %0, %arg1 : i32
    %c0_i32 = arith.constant 0 : i32
    %c0_i32_0 = arith.constant 0 : i32
    %c0_i32_1 = arith.constant 0 : i32
    %c0_i32_2 = arith.constant 0 : i32
    %c0_i32_3 = arith.constant 0 : i32
    return %1, %c0_i32, %c0_i32_0, %c0_i32_1, %c0_i32_2 : i32, i32, i32, i32, i32
  }
  func.func @transform_1(%arg0: i32, %arg1: i32) -> (i32, i32) {
    %c0_i32 = arith.constant 0 : i32
    %c0_i32_0 = arith.constant 0 : i32
    %c0_i32_1 = arith.constant 0 : i32
    return %c0_i32, %c0_i32_0 : i32, i32
  }
  func.func @transform_2(%arg0: i32, %arg1: i32) -> (i32, i32, i32, i32) {
    %c0_i32 = arith.constant 0 : i32
    %c0_i32_0 = arith.constant 0 : i32
    %c0_i32_1 = arith.constant 0 : i32
    return %arg0, %arg1, %c0_i32, %c0_i32_0 : i32, i32, i32, i32
  }
}

</mosaic_0001>

<llo_original>
// kernel: downsample_forward.1
$region0: #{downsample_forward.1}
  #allocation0 [shape = 'u32[]', space=smem, size = 0x4, offset = 0x4, fixed_abs, tag = 'smem constant byte address 0x4 - core index']
  #allocation1 [shape = 'u32[144,128]{1,0:T(1,128)}', space=vmem, size = 0x12000, scoped, tag = 'internal scratch']
  #allocation2 [shape = 'f32[8,8,128]{2,1,0:T(8,128)}', space=vmem, size = 0x8000, scoped, tag = 'scratch operand']
  %s0 = inlined_call_operand.vmem [shape: f32[2,4,9,9,8], index: 0, kind: input, shape index: {}]
  %s1 = inlined_call_operand.vmem [shape: f32[128,16], index: 1, kind: input, shape index: {}]
  %s2 = inlined_call_operand.hbm [shape: f32[2,8,8,16], index: 2, kind: output, shape index: {}]
  %s3 = sld [smem:[#allocation0]]
  $region41: #{downsample_forward.1} parent=0
    _
  %s5 = ssub.s32 1, %s3
  %s6 = scalar_select 0, %s5, %s3
  $region1: #{downsample_forward.1} parent=0
    #allocation3 [shape = 'u8[65536]{0}', space=vmem, size = 0x10000, scoped, tag = 'output window, operand 0']
    #allocation4 [shape = 's32[2]{0}', space=sflag, size = 0x8, scoped, tag = 'scoped memory for downsample_forward.1']
    %7 = vsyncpa [#allocation4], 0
    %s8 = scalar_lea.sflag [#allocation4], 1
    %9 = vsyncpa %s8, 0
    loop: start=0, step=1, limit=4
    $region2: #{downsample_forward.1} parent=1 // loop_pre_header
      _
    $region3: #{downsample_forward.1} parent=1 // loop_header
      %s11 = sphi 0, %s15
      %p12 = scmp.ge.s32.totalorder %s11, 4
      %s18 = sphi 0, %s30
      %s19 = sphi 0, %s26
      %s20 = sphi 0, %s18
      %s21 = sphi 0, %s19
      %s22 = sphi 0, %s20
      %s23 = sphi 0, %s21
      %s35 = sphi 0, %s37
      %s38 = sphi 0, %s35
      %s39 = sphi 0, %s38
      %s55 = sphi 0, %s39
      %s59 = sphi 0, %s59
      %s61 = sphi 0, %s59
      %s62 = sphi 0, %s61
      %s76 = sphi 0, %s62
      %s84 = sphi 0, %s86
      %s87 = sphi 0, %s84
      %s88 = sphi 0, %s87
      %s104 = sphi 0, %s88
    $region4: #{downsample_forward.1} parent=1 // loop_header_branch
      %14 = sbr.rel (%p12) target = $region8
    $region5: #{downsample_forward.1} parent=1 // loop_body
      %s16 = ssub.s32 %s11, 1
      %s17 = ssub.s32 %s11, 2
      %s24 = sadd.s32 1, %s19
      %p25 = scmp.ge.s32.totalorder %s24, 1
      %s26 = scalar_select %p25, 0, %s24
      %s27 = sadd.s32 1, %s18
      %s28 = scalar_select %p25, %s27, %s18
      %p29 = scmp.ge.s32.totalorder %s28, 2
      %s30 = scalar_select %p29, 0, %s28
      %s31 = sadd.s32 %s18, %s19
      %s32 = sadd.s32 %s30, %s26
      %s33 = ssub.s32 %s31, %s32
      %p34 = scmp.eq.s32.totalorder %s33, 0
      %s36 = sadd.s32 %s35, 1
      %s37 = scalar_select %p34, %s35, %s36
      %p40 = pneg %p34
      %p41 = scmp.eq.s32.totalorder %s11, 1
      %p42 = por %p40, %p41
      %p43 = scmp.ne.s32.totalorder %s35, %s38
      %p44 = scmp.eq.s32.totalorder %s11, 0
      %p45 = por %p43, %p44
      %p46 = scmp.ne.s32.totalorder %s35, %s38
      %p47 = scmp.eq.s32.totalorder %s16, 1
      %p48 = por %p46, %p47
      %p49 = scmp.ne.s32.totalorder %s38, %s39
      %p50 = scmp.eq.s32.totalorder %s16, 0
      %p51 = por %p49, %p50
      %p52 = scmp.ne.s32.totalorder %s38, %s39
      %p53 = scmp.eq.s32.totalorder %s17, 1
      %p54 = por %p52, %p53
      %p56 = scmp.ne.s32.totalorder %s39, %s55
      %p57 = scmp.eq.s32.totalorder %s17, 0
      %p58 = por %p56, %p57
      %s60 = sadd.s32 %s59, 1
      %p63 = scmp.eq.s32.totalorder %s11, 1
      %p64 = scmp.ne.s32.totalorder %s59, %s61
      %p65 = scmp.eq.s32.totalorder %s11, 0
      %p66 = por %p64, %p65
      %p67 = scmp.ne.s32.totalorder %s59, %s61
      %p68 = scmp.eq.s32.totalorder %s16, 1
      %p69 = por %p67, %p68
      %p70 = scmp.ne.s32.totalorder %s61, %s62
      %p71 = scmp.eq.s32.totalorder %s16, 0
      %p72 = por %p70, %p71
      %p73 = scmp.ne.s32.totalorder %s61, %s62
      %p74 = scmp.eq.s32.totalorder %s17, 1
      %p75 = por %p73, %p74
      %p77 = scmp.ne.s32.totalorder %s62, %s76
      %p78 = scmp.eq.s32.totalorder %s17, 0
      %p79 = por %p77, %p78
      %s80 = ssub.s32 %s18, %s30
      %s81 = ssub.s32 %s19, %s26
      %s82 = sor.u32 %s80, %s81
      %p83 = scmp.eq.s32.totalorder %s82, 0
      %s85 = sadd.s32 %s84, 1
      %s86 = scalar_select %p83, %s84, %s85
      %p89 = pneg %p83
      %p90 = scmp.eq.s32.totalorder %s11, 1
      %p91 = por %p89, %p90
      %p92 = scmp.ne.s32.totalorder %s84, %s87
      %p93 = scmp.eq.s32.totalorder %s11, 0
      %p94 = por %p92, %p93
      %p95 = scmp.ne.s32.totalorder %s84, %s87
      %p96 = scmp.eq.s32.totalorder %s16, 1
      %p97 = por %p95, %p96
      %p98 = scmp.ne.s32.totalorder %s87, %s88
      %p99 = scmp.eq.s32.totalorder %s16, 0
      %p100 = por %p98, %p99
      %p101 = scmp.ne.s32.totalorder %s87, %s88
      %p102 = scmp.eq.s32.totalorder %s17, 1
      %p103 = por %p101, %p102
      %p105 = scmp.ne.s32.totalorder %s88, %s104
      %p106 = scmp.eq.s32.totalorder %s17, 0
      %p107 = por %p105, %p106
      %p108 = scmp.le.s32.totalorder 1, %s11
      %p109 = scmp.lt.s32.totalorder %s11, 3
      %p110 = pnand %p108, %p109
      %p111 = pneg %p110
      // Predicated region
      $region9: #{downsample_forward.1} parent=5 // pred_check
        _
      $region10: #{downsample_forward.1} parent=5 // pred_check_branch
        %113 = sbr.rel (%p110) target = $region12
      $region11: #{downsample_forward.1} parent=5 // pred_region
        %s114 = ssub.s32 %s11, 1
        // Predicated region
        $region13: #{downsample_forward.1} parent=11 // pred_check
          %p115 = pneg %p72
        $region14: #{downsample_forward.1} parent=11 // pred_check_branch
          %117 = sbr.rel (%p115) target = $region16
        $region15: #{downsample_forward.1} parent=11 // pred_region
          _
        $region16: #{downsample_forward.1} parent=11 // pred_fallthru
          _
      $region12: #{downsample_forward.1} parent=5 // pred_fallthru
        _
      %p118 = scmp.lt.s32.totalorder %s11, 2
      // Predicated region
      $region17: #{downsample_forward.1} parent=5 // pred_check
        %p119 = pneg %p118
      $region18: #{downsample_forward.1} parent=5 // pred_check_branch
        %121 = sbr.rel (%p119) target = $region20
      $region19: #{downsample_forward.1} parent=5 // pred_region
        // Predicated region
        $region21: #{downsample_forward.1} parent=19 // pred_check
          %p122 = pneg %p45
        $region22: #{downsample_forward.1} parent=19 // pred_check_branch
          %124 = sbr.rel (%p122) target = $region24
        $region23: #{downsample_forward.1} parent=19 // pred_region
          %s125 = sadd.s32 %s18, %s19
          %p126 = scmp.lt.s32.totalorder %s125, 1
          %s127 = scalar_select %p126, %s125, 1
          %s128 = smul.addr %s127, 72
          %s129 = smul.addr %s128, 8
          %s130 = scalar_lea.vmem %s0, %s129
          %s131 = sadd.s32 %s18, %s19
        $region24: #{downsample_forward.1} parent=19 // pred_fallthru
          _
      $region20: #{downsample_forward.1} parent=5 // pred_fallthru
        _
      %p132 = scmp.le.s32.totalorder 1, %s11
      %p133 = scmp.lt.s32.totalorder %s11, 3
      %p134 = pnand %p132, %p133
      %p135 = pneg %p134
      // Predicated region
      $region25: #{downsample_forward.1} parent=5 // pred_check
        _
      $region26: #{downsample_forward.1} parent=5 // pred_check_branch
        %137 = sbr.rel (%p134) target = $region28
      $region27: #{downsample_forward.1} parent=5 // pred_region
        %s138 = ssub.s32 %s11, 1
        %s139 = sadd.s32 %s20, %s21
        %p140 = scmp.lt.s32.totalorder %s139, 1
        %s141 = scalar_select %p140, %s139, 1
        %s142 = smul.addr %s141, 72
        %s143 = smul.addr %s142, 8
        %s144 = scalar_lea.vmem %s0, %s143
        %p145 = pneg %p51
        %p146 = pneg %p48
        %p147 = pneg %p72
        %p148 = pneg %p69
        %p149 = pneg %p100
        %p150 = pneg %p97
        %s151 = sand.u32 %s87, 1
        %s152 = scalar_lea.sflag [#allocation4], %s151
        %s153 = sand.u32 %s87, 1
        %s154 = smul.addr %s153, 64
        %s155 = scalar_lea.vmem [#allocation3], %s154
        %s156 = sadd.s32 %s20, %s21
        %p157 = scmp.lt.s32.totalorder %s156, 1
        %s158 = scalar_select %p157, %s156, 1
        %s159 = smul.addr %s158, 72
        %s160 = smul.addr %s159, 8
        %s161 = scalar_lea.vmem %s0, %s160
        %s162 = sadd.s32 %s20, %s21
        %s163 = smul.u32 8, %s21
        %v164 = vld [vmem:[%s161] sm:$0xff]
        %v165 = vld [vmem:[%s161 + $0x10] sm:$0xff]
        %v166 = vld [vmem:[%s161 + $0x20] sm:$0xff]
        %v167 = vld [vmem:[%s161 + $0x30] sm:$0xff]
        %v168 = vld [vmem:[%s161 + $0x40] sm:$0xff]
        %v169 = vld [vmem:[%s161 + $0x50] sm:$0xff]
        %v170 = vld [vmem:[%s161 + $0x60] sm:$0xff]
        %v171 = vld [vmem:[%s161 + $0x70] sm:$0xff]
        %vm172 = vcmask 64512
        %173 = vst.msk [vmem:[#allocation2] sm:$0xff] %vm172, %v164
        %174 = vst.msk [vmem:[#allocation2 + $0x8] sm:$0xff] %vm172, %v165
        %175 = vst.msk [vmem:[#allocation2 + $0x10] sm:$0xff] %vm172, %v166
        %176 = vst.msk [vmem:[#allocation2 + $0x18] sm:$0xff] %vm172, %v167
        %177 = vst.msk [vmem:[#allocation2 + $0x20] sm:$0xff] %vm172, %v168
        %178 = vst.msk [vmem:[#allocation2 + $0x28] sm:$0xff] %vm172, %v169
        %179 = vst.msk [vmem:[#allocation2 + $0x30] sm:$0xff] %vm172, %v170
        %180 = vst.msk [vmem:[#allocation2 + $0x38] sm:$0xff] %vm172, %v171
        %s181 = scalar_lea.vmem %s161, 144
        %v182 = vld [vmem:[%s181] sm:$0xff]
        %v183 = vld [vmem:[%s181 + $0x10] sm:$0xff]
        %v184 = vld [vmem:[%s181 + $0x20] sm:$0xff]
        %v185 = vld [vmem:[%s181 + $0x30] sm:$0xff]
        %v186 = vld [vmem:[%s181 + $0x40] sm:$0xff]
        %v187 = vld [vmem:[%s181 + $0x50] sm:$0xff]
        %v188 = vld [vmem:[%s181 + $0x60] sm:$0xff]
        %v189 = vld [vmem:[%s181 + $0x70] sm:$0xff]
        %198 = vrot.lane.b32.xlu0 %v182, 8
        %v199 = vpop.permute.xlu0 %198
        %200 = vrot.lane.b32.xlu0 %v183, 8
        %v201 = vpop.permute.xlu0 %200
        %202 = vrot.lane.b32.xlu0 %v184, 8
        %v203 = vpop.permute.xlu0 %202
        %204 = vrot.lane.b32.xlu0 %v185, 8
        %v205 = vpop.permute.xlu0 %204
        %206 = vrot.lane.b32.xlu0 %v186, 8
        %v207 = vpop.permute.xlu0 %206
        %208 = vrot.lane.b32.xlu0 %v187, 8
        %v209 = vpop.permute.xlu0 %208
        %210 = vrot.lane.b32.xlu0 %v188, 8
        %v211 = vpop.permute.xlu0 %210
        %212 = vrot.lane.b32.xlu0 %v189, 8
        %v213 = vpop.permute.xlu0 %212
        %vm222 = vcmask 130112
        %223 = vst.msk [vmem:[#allocation2] sm:$0xff] %vm222, %v199
        %224 = vst.msk [vmem:[#allocation2 + $0x8] sm:$0xff] %vm222, %v201
        %225 = vst.msk [vmem:[#allocation2 + $0x10] sm:$0xff] %vm222, %v203
        %226 = vst.msk [vmem:[#allocation2 + $0x18] sm:$0xff] %vm222, %v205
        %227 = vst.msk [vmem:[#allocation2 + $0x20] sm:$0xff] %vm222, %v207
        %228 = vst.msk [vmem:[#allocation2 + $0x28] sm:$0xff] %vm222, %v209
        %229 = vst.msk [vmem:[#allocation2 + $0x30] sm:$0xff] %vm222, %v211
        %230 = vst.msk [vmem:[#allocation2 + $0x38] sm:$0xff] %vm222, %v213
        %v231 = vld [vmem:[%s161 + $0x1] sm:$0xff]
        %v232 = vld [vmem:[%s161 + $0x11] sm:$0xff]
        %v233 = vld [vmem:[%s161 + $0x21] sm:$0xff]
        %v234 = vld [vmem:[%s161 + $0x31] sm:$0xff]
        %v235 = vld [vmem:[%s161 + $0x41] sm:$0xff]
        %v236 = vld [vmem:[%s161 + $0x51] sm:$0xff]
        %v237 = vld [vmem:[%s161 + $0x61] sm:$0xff]
        %v238 = vld [vmem:[%s161 + $0x71] sm:$0xff]
        %247 = vrot.lane.b32.xlu0 %v231, 16
        %v248 = vpop.permute.xlu0 %247
        %249 = vrot.lane.b32.xlu0 %v232, 16
        %v250 = vpop.permute.xlu0 %249
        %251 = vrot.lane.b32.xlu0 %v233, 16
        %v252 = vpop.permute.xlu0 %251
        %253 = vrot.lane.b32.xlu0 %v234, 16
        %v254 = vpop.permute.xlu0 %253
        %255 = vrot.lane.b32.xlu0 %v235, 16
        %v256 = vpop.permute.xlu0 %255
        %257 = vrot.lane.b32.xlu0 %v236, 16
        %v258 = vpop.permute.xlu0 %257
        %259 = vrot.lane.b32.xlu0 %v237, 16
        %v260 = vpop.permute.xlu0 %259
        %261 = vrot.lane.b32.xlu0 %v238, 16
        %v262 = vpop.permute.xlu0 %261
        %vm271 = vcmask 195712
        %272 = vst.msk [vmem:[#allocation2] sm:$0xff] %vm271, %v248
        %273 = vst.msk [vmem:[#allocation2 + $0x8] sm:$0xff] %vm271, %v250
        %274 = vst.msk [vmem:[#allocation2 + $0x10] sm:$0xff] %vm271, %v252
        %275 = vst.msk [vmem:[#allocation2 + $0x18] sm:$0xff] %vm271, %v254
        %276 = vst.msk [vmem:[#allocation2 + $0x20] sm:$0xff] %vm271, %v256
        %277 = vst.msk [vmem:[#allocation2 + $0x28] sm:$0xff] %vm271, %v258
        %278 = vst.msk [vmem:[#allocation2 + $0x30] sm:$0xff] %vm271, %v260
        %279 = vst.msk [vmem:[#allocation2 + $0x38] sm:$0xff] %vm271, %v262
        %v280 = vld [vmem:[%s181 + $0x1] sm:$0xff]
        %v281 = vld [vmem:[%s181 + $0x11] sm:$0xff]
        %v282 = vld [vmem:[%s181 + $0x21] sm:$0xff]
        %v283 = vld [vmem:[%s181 + $0x31] sm:$0xff]
        %v284 = vld [vmem:[%s181 + $0x41] sm:$0xff]
        %v285 = vld [vmem:[%s181 + $0x51] sm:$0xff]
        %v286 = vld [vmem:[%s181 + $0x61] sm:$0xff]
        %v287 = vld [vmem:[%s181 + $0x71] sm:$0xff]
        %296 = vrot.lane.b32.xlu0 %v280, 24
        %v297 = vpop.permute.xlu0 %296
        %298 = vrot.lane.b32.xlu0 %v281, 24
        %v299 = vpop.permute.xlu0 %298
        %300 = vrot.lane.b32.xlu0 %v282, 24
        %v301 = vpop.permute.xlu0 %300
        %302 = vrot.lane.b32.xlu0 %v283, 24
        %v303 = vpop.permute.xlu0 %302
        %304 = vrot.lane.b32.xlu0 %v284, 24
        %v305 = vpop.permute.xlu0 %304
        %306 = vrot.lane.b32.xlu0 %v285, 24
        %v307 = vpop.permute.xlu0 %306
        %308 = vrot.lane.b32.xlu0 %v286, 24
        %v309 = vpop.permute.xlu0 %308
        %310 = vrot.lane.b32.xlu0 %v287, 24
        %v311 = vpop.permute.xlu0 %310
        %vm320 = vcmask 261312
        %321 = vst.msk [vmem:[#allocation2] sm:$0xff] %vm320, %v297
        %322 = vst.msk [vmem:[#allocation2 + $0x8] sm:$0xff] %vm320, %v299
        %323 = vst.msk [vmem:[#allocation2 + $0x10] sm:$0xff] %vm320, %v301
        %324 = vst.msk [vmem:[#allocation2 + $0x18] sm:$0xff] %vm320, %v303
        %325 = vst.msk [vmem:[#allocation2 + $0x20] sm:$0xff] %vm320, %v305
        %326 = vst.msk [vmem:[#allocation2 + $0x28] sm:$0xff] %vm320, %v307
        %327 = vst.msk [vmem:[#allocation2 + $0x30] sm:$0xff] %vm320, %v309
        %328 = vst.msk [vmem:[#allocation2 + $0x38] sm:$0xff] %vm320, %v311
        %s329 = scalar_lea.vmem %s161, 288
        %v330 = vld [vmem:[%s329] sm:$0xff]
        %v331 = vld [vmem:[%s329 + $0x10] sm:$0xff]
        %v332 = vld [vmem:[%s329 + $0x20] sm:$0xff]
        %v333 = vld [vmem:[%s329 + $0x30] sm:$0xff]
        %v334 = vld [vmem:[%s329 + $0x40] sm:$0xff]
        %v335 = vld [vmem:[%s329 + $0x50] sm:$0xff]
        %v336 = vld [vmem:[%s329 + $0x60] sm:$0xff]
        %v337 = vld [vmem:[%s329 + $0x70] sm:$0xff]
        %346 = vrot.lane.b32.xlu0 %v330, 32
        %v347 = vpop.permute.xlu0 %346
        %348 = vrot.lane.b32.xlu0 %v331, 32
        %v349 = vpop.permute.xlu0 %348
        %350 = vrot.lane.b32.xlu0 %v332, 32
        %v351 = vpop.permute.xlu0 %350
        %352 = vrot.lane.b32.xlu0 %v333, 32
        %v353 = vpop.permute.xlu0 %352
        %354 = vrot.lane.b32.xlu0 %v334, 32
        %v355 = vpop.permute.xlu0 %354
        %356 = vrot.lane.b32.xlu0 %v335, 32
        %v357 = vpop.permute.xlu0 %356
        %358 = vrot.lane.b32.xlu0 %v336, 32
        %v359 = vpop.permute.xlu0 %358
        %360 = vrot.lane.b32.xlu0 %v337, 32
        %v361 = vpop.permute.xlu0 %360
        %vm370 = vcmask 326912
        %371 = vst.msk [vmem:[#allocation2] sm:$0xff] %vm370, %v347
        %372 = vst.msk [vmem:[#allocation2 + $0x8] sm:$0xff] %vm370, %v349
        %373 = vst.msk [vmem:[#allocation2 + $0x10] sm:$0xff] %vm370, %v351
        %374 = vst.msk [vmem:[#allocation2 + $0x18] sm:$0xff] %vm370, %v353
        %375 = vst.msk [vmem:[#allocation2 + $0x20] sm:$0xff] %vm370, %v355
        %376 = vst.msk [vmem:[#allocation2 + $0x28] sm:$0xff] %vm370, %v357
        %377 = vst.msk [vmem:[#allocation2 + $0x30] sm:$0xff] %vm370, %v359
        %378 = vst.msk [vmem:[#allocation2 + $0x38] sm:$0xff] %vm370, %v361
        %s379 = scalar_lea.vmem %s161, 432
        %v380 = vld [vmem:[%s379] sm:$0xff]
        %v381 = vld [vmem:[%s379 + $0x10] sm:$0xff]
        %v382 = vld [vmem:[%s379 + $0x20] sm:$0xff]
        %v383 = vld [vmem:[%s379 + $0x30] sm:$0xff]
        %v384 = vld [vmem:[%s379 + $0x40] sm:$0xff]
        %v385 = vld [vmem:[%s379 + $0x50] sm:$0xff]
        %v386 = vld [vmem:[%s379 + $0x60] sm:$0xff]
        %v387 = vld [vmem:[%s379 + $0x70] sm:$0xff]
        %396 = vrot.lane.b32.xlu0 %v380, 40
        %v397 = vpop.permute.xlu0 %396
        %398 = vrot.lane.b32.xlu0 %v381, 40
        %v399 = vpop.permute.xlu0 %398
        %400 = vrot.lane.b32.xlu0 %v382, 40
        %v401 = vpop.permute.xlu0 %400
        %402 = vrot.lane.b32.xlu0 %v383, 40
        %v403 = vpop.permute.xlu0 %402
        %404 = vrot.lane.b32.xlu0 %v384, 40
        %v405 = vpop.permute.xlu0 %404
        %406 = vrot.lane.b32.xlu0 %v385, 40
        %v407 = vpop.permute.xlu0 %406
        %408 = vrot.lane.b32.xlu0 %v386, 40
        %v409 = vpop.permute.xlu0 %408
        %410 = vrot.lane.b32.xlu0 %v387, 40
        %v411 = vpop.permute.xlu0 %410
        %vm420 = vcmask 392512
        %421 = vst.msk [vmem:[#allocation2] sm:$0xff] %vm420, %v397
        %422 = vst.msk [vmem:[#allocation2 + $0x8] sm:$0xff] %vm420, %v399
        %423 = vst.msk [vmem:[#allocation2 + $0x10] sm:$0xff] %vm420, %v401
        %424 = vst.msk [vmem:[#allocation2 + $0x18] sm:$0xff] %vm420, %v403
        %425 = vst.msk [vmem:[#allocation2 + $0x20] sm:$0xff] %vm420, %v405
        %426 = vst.msk [vmem:[#allocation2 + $0x28] sm:$0xff] %vm420, %v407
        %427 = vst.msk [vmem:[#allocation2 + $0x30] sm:$0xff] %vm420, %v409
        %428 = vst.msk [vmem:[#allocation2 + $0x38] sm:$0xff] %vm420, %v411
        %v429 = vld [vmem:[%s329 + $0x1] sm:$0xff]
        %v430 = vld [vmem:[%s329 + $0x11] sm:$0xff]
        %v431 = vld [vmem:[%s329 + $0x21] sm:$0xff]
        %v432 = vld [vmem:[%s329 + $0x31] sm:$0xff]
        %v433 = vld [vmem:[%s329 + $0x41] sm:$0xff]
        %v434 = vld [vmem:[%s329 + $0x51] sm:$0xff]
        %v435 = vld [vmem:[%s329 + $0x61] sm:$0xff]
        %v436 = vld [vmem:[%s329 + $0x71] sm:$0xff]
        %445 = vrot.lane.b32.xlu0 %v429, 48
        %v446 = vpop.permute.xlu0 %445
        %447 = vrot.lane.b32.xlu0 %v430, 48
        %v448 = vpop.permute.xlu0 %447
        %449 = vrot.lane.b32.xlu0 %v431, 48
        %v450 = vpop.permute.xlu0 %449
        %451 = vrot.lane.b32.xlu0 %v432, 48
        %v452 = vpop.permute.xlu0 %451
        %453 = vrot.lane.b32.xlu0 %v433, 48
        %v454 = vpop.permute.xlu0 %453
        %455 = vrot.lane.b32.xlu0 %v434, 48
        %v456 = vpop.permute.xlu0 %455
        %457 = vrot.lane.b32.xlu0 %v435, 48
        %v458 = vpop.permute.xlu0 %457
        %459 = vrot.lane.b32.xlu0 %v436, 48
        %v460 = vpop.permute.xlu0 %459
        %vm469 = vcmask 458112
        %470 = vst.msk [vmem:[#allocation2] sm:$0xff] %vm469, %v446
        %471 = vst.msk [vmem:[#allocation2 + $0x8] sm:$0xff] %vm469, %v448
        %472 = vst.msk [vmem:[#allocation2 + $0x10] sm:$0xff] %vm469, %v450
        %473 = vst.msk [vmem:[#allocation2 + $0x18] sm:$0xff] %vm469, %v452
        %474 = vst.msk [vmem:[#allocation2 + $0x20] sm:$0xff] %vm469, %v454
        %475 = vst.msk [vmem:[#allocation2 + $0x28] sm:$0xff] %vm469, %v456
        %476 = vst.msk [vmem:[#allocation2 + $0x30] sm:$0xff] %vm469, %v458
        %477 = vst.msk [vmem:[#allocation2 + $0x38] sm:$0xff] %vm469, %v460
        %v478 = vld [vmem:[%s379 + $0x1] sm:$0xff]
        %v479 = vld [vmem:[%s379 + $0x11] sm:$0xff]
        %v480 = vld [vmem:[%s379 + $0x21] sm:$0xff]
        %v481 = vld [vmem:[%s379 + $0x31] sm:$0xff]
        %v482 = vld [vmem:[%s379 + $0x41] sm:$0xff]
        %v483 = vld [vmem:[%s379 + $0x51] sm:$0xff]
        %v484 = vld [vmem:[%s379 + $0x61] sm:$0xff]
        %v485 = vld [vmem:[%s379 + $0x71] sm:$0xff]
        %494 = vrot.lane.b32.xlu0 %v478, 56
        %v495 = vpop.permute.xlu0 %494
        %496 = vrot.lane.b32.xlu0 %v479, 56
        %v497 = vpop.permute.xlu0 %496
        %498 = vrot.lane.b32.xlu0 %v480, 56
        %v499 = vpop.permute.xlu0 %498
        %500 = vrot.lane.b32.xlu0 %v481, 56
        %v501 = vpop.permute.xlu0 %500
        %502 = vrot.lane.b32.xlu0 %v482, 56
        %v503 = vpop.permute.xlu0 %502
        %504 = vrot.lane.b32.xlu0 %v483, 56
        %v505 = vpop.permute.xlu0 %504
        %506 = vrot.lane.b32.xlu0 %v484, 56
        %v507 = vpop.permute.xlu0 %506
        %508 = vrot.lane.b32.xlu0 %v485, 56
        %v509 = vpop.permute.xlu0 %508
        %vm518 = vcmask 523712
        %519 = vst.msk [vmem:[#allocation2] sm:$0xff] %vm518, %v495
        %520 = vst.msk [vmem:[#allocation2 + $0x8] sm:$0xff] %vm518, %v497
        %521 = vst.msk [vmem:[#allocation2 + $0x10] sm:$0xff] %vm518, %v499
        %522 = vst.msk [vmem:[#allocation2 + $0x18] sm:$0xff] %vm518, %v501
        %523 = vst.msk [vmem:[#allocation2 + $0x20] sm:$0xff] %vm518, %v503
        %524 = vst.msk [vmem:[#allocation2 + $0x28] sm:$0xff] %vm518, %v505
        %525 = vst.msk [vmem:[#allocation2 + $0x30] sm:$0xff] %vm518, %v507
        %526 = vst.msk [vmem:[#allocation2 + $0x38] sm:$0xff] %vm518, %v509
        %s527 = scalar_lea.vmem %s161, 16
        %v528 = vld [vmem:[%s527] sm:$0xff]
        %v529 = vld [vmem:[%s527 + $0x10] sm:$0xff]
        %v530 = vld [vmem:[%s527 + $0x20] sm:$0xff]
        %v531 = vld [vmem:[%s527 + $0x30] sm:$0xff]
        %v532 = vld [vmem:[%s527 + $0x40] sm:$0xff]
        %v533 = vld [vmem:[%s527 + $0x50] sm:$0xff]
        %v534 = vld [vmem:[%s527 + $0x60] sm:$0xff]
        %v535 = vld [vmem:[%s527 + $0x70] sm:$0xff]
        %544 = vrot.lane.b32.xlu0 %v528, 64
        %v545 = vpop.permute.xlu0 %544
        %546 = vrot.lane.b32.xlu0 %v529, 64
        %v547 = vpop.permute.xlu0 %546
        %548 = vrot.lane.b32.xlu0 %v530, 64
        %v549 = vpop.permute.xlu0 %548
        %550 = vrot.lane.b32.xlu0 %v531, 64
        %v551 = vpop.permute.xlu0 %550
        %552 = vrot.lane.b32.xlu0 %v532, 64
        %v553 = vpop.permute.xlu0 %552
        %554 = vrot.lane.b32.xlu0 %v533, 64
        %v555 = vpop.permute.xlu0 %554
        %556 = vrot.lane.b32.xlu0 %v534, 64
        %v557 = vpop.permute.xlu0 %556
        %558 = vrot.lane.b32.xlu0 %v535, 64
        %v559 = vpop.permute.xlu0 %558
        %vm568 = vcmask 589312
        %569 = vst.msk [vmem:[#allocation2] sm:$0xff] %vm568, %v545
        %570 = vst.msk [vmem:[#allocation2 + $0x8] sm:$0xff] %vm568, %v547
        %571 = vst.msk [vmem:[#allocation2 + $0x10] sm:$0xff] %vm568, %v549
        %572 = vst.msk [vmem:[#allocation2 + $0x18] sm:$0xff] %vm568, %v551
        %573 = vst.msk [vmem:[#allocation2 + $0x20] sm:$0xff] %vm568, %v553
        %574 = vst.msk [vmem:[#allocation2 + $0x28] sm:$0xff] %vm568, %v555
        %575 = vst.msk [vmem:[#allocation2 + $0x30] sm:$0xff] %vm568, %v557
        %576 = vst.msk [vmem:[#allocation2 + $0x38] sm:$0xff] %vm568, %v559
        %s577 = scalar_lea.vmem %s161, 160
        %v578 = vld [vmem:[%s577] sm:$0xff]
        %v579 = vld [vmem:[%s577 + $0x10] sm:$0xff]
        %v580 = vld [vmem:[%s577 + $0x20] sm:$0xff]
        %v581 = vld [vmem:[%s577 + $0x30] sm:$0xff]
        %v582 = vld [vmem:[%s577 + $0x40] sm:$0xff]
        %v583 = vld [vmem:[%s577 + $0x50] sm:$0xff]
        %v584 = vld [vmem:[%s577 + $0x60] sm:$0xff]
        %v585 = vld [vmem:[%s577 + $0x70] sm:$0xff]
        %594 = vrot.lane.b32.xlu0 %v578, 72
        %v595 = vpop.permute.xlu0 %594
        %596 = vrot.lane.b32.xlu0 %v579, 72
        %v597 = vpop.permute.xlu0 %596
        %598 = vrot.lane.b32.xlu0 %v580, 72
        %v599 = vpop.permute.xlu0 %598
        %600 = vrot.lane.b32.xlu0 %v581, 72
        %v601 = vpop.permute.xlu0 %600
        %602 = vrot.lane.b32.xlu0 %v582, 72
        %v603 = vpop.permute.xlu0 %602
        %604 = vrot.lane.b32.xlu0 %v583, 72
        %v605 = vpop.permute.xlu0 %604
        %606 = vrot.lane.b32.xlu0 %v584, 72
        %v607 = vpop.permute.xlu0 %606
        %608 = vrot.lane.b32.xlu0 %v585, 72
        %v609 = vpop.permute.xlu0 %608
        %vm618 = vcmask 654912
        %619 = vst.msk [vmem:[#allocation2] sm:$0xff] %vm618, %v595
        %620 = vst.msk [vmem:[#allocation2 + $0x8] sm:$0xff] %vm618, %v597
        %621 = vst.msk [vmem:[#allocation2 + $0x10] sm:$0xff] %vm618, %v599
        %622 = vst.msk [vmem:[#allocation2 + $0x18] sm:$0xff] %vm618, %v601
        %623 = vst.msk [vmem:[#allocation2 + $0x20] sm:$0xff] %vm618, %v603
        %624 = vst.msk [vmem:[#allocation2 + $0x28] sm:$0xff] %vm618, %v605
        %625 = vst.msk [vmem:[#allocation2 + $0x30] sm:$0xff] %vm618, %v607
        %626 = vst.msk [vmem:[#allocation2 + $0x38] sm:$0xff] %vm618, %v609
        %v627 = vld [vmem:[%s527 + $0x1] sm:$0xff]
        %v628 = vld [vmem:[%s527 + $0x11] sm:$0xff]
        %v629 = vld [vmem:[%s527 + $0x21] sm:$0xff]
        %v630 = vld [vmem:[%s527 + $0x31] sm:$0xff]
        %v631 = vld [vmem:[%s527 + $0x41] sm:$0xff]
        %v632 = vld [vmem:[%s527 + $0x51] sm:$0xff]
        %v633 = vld [vmem:[%s527 + $0x61] sm:$0xff]
        %v634 = vld [vmem:[%s527 + $0x71] sm:$0xff]
        %643 = vrot.lane.b32.xlu0 %v627, 80
        %v644 = vpop.permute.xlu0 %643
        %645 = vrot.lane.b32.xlu0 %v628, 80
        %v646 = vpop.permute.xlu0 %645
        %647 = vrot.lane.b32.xlu0 %v629, 80
        %v648 = vpop.permute.xlu0 %647
        %649 = vrot.lane.b32.xlu0 %v630, 80
        %v650 = vpop.permute.xlu0 %649
        %651 = vrot.lane.b32.xlu0 %v631, 80
        %v652 = vpop.permute.xlu0 %651
        %653 = vrot.lane.b32.xlu0 %v632, 80
        %v654 = vpop.permute.xlu0 %653
        %655 = vrot.lane.b32.xlu0 %v633, 80
        %v656 = vpop.permute.xlu0 %655
        %657 = vrot.lane.b32.xlu0 %v634, 80
        %v658 = vpop.permute.xlu0 %657
        %vm667 = vcmask 720512
        %668 = vst.msk [vmem:[#allocation2] sm:$0xff] %vm667, %v644
        %669 = vst.msk [vmem:[#allocation2 + $0x8] sm:$0xff] %vm667, %v646
        %670 = vst.msk [vmem:[#allocation2 + $0x10] sm:$0xff] %vm667, %v648
        %671 = vst.msk [vmem:[#allocation2 + $0x18] sm:$0xff] %vm667, %v650
        %672 = vst.msk [vmem:[#allocation2 + $0x20] sm:$0xff] %vm667, %v652
        %673 = vst.msk [vmem:[#allocation2 + $0x28] sm:$0xff] %vm667, %v654
        %674 = vst.msk [vmem:[#allocation2 + $0x30] sm:$0xff] %vm667, %v656
        %675 = vst.msk [vmem:[#allocation2 + $0x38] sm:$0xff] %vm667, %v658
        %v676 = vld [vmem:[%s577 + $0x1] sm:$0xff]
        %v677 = vld [vmem:[%s577 + $0x11] sm:$0xff]
        %v678 = vld [vmem:[%s577 + $0x21] sm:$0xff]
        %v679 = vld [vmem:[%s577 + $0x31] sm:$0xff]
        %v680 = vld [vmem:[%s577 + $0x41] sm:$0xff]
        %v681 = vld [vmem:[%s577 + $0x51] sm:$0xff]
        %v682 = vld [vmem:[%s577 + $0x61] sm:$0xff]
        %v683 = vld [vmem:[%s577 + $0x71] sm:$0xff]
        %692 = vrot.lane.b32.xlu0 %v676, 88
        %v693 = vpop.permute.xlu0 %692
        %694 = vrot.lane.b32.xlu0 %v677, 88
        %v695 = vpop.permute.xlu0 %694
        %696 = vrot.lane.b32.xlu0 %v678, 88
        %v697 = vpop.permute.xlu0 %696
        %698 = vrot.lane.b32.xlu0 %v679, 88
        %v699 = vpop.permute.xlu0 %698
        %700 = vrot.lane.b32.xlu0 %v680, 88
        %v701 = vpop.permute.xlu0 %700
        %702 = vrot.lane.b32.xlu0 %v681, 88
        %v703 = vpop.permute.xlu0 %702
        %704 = vrot.lane.b32.xlu0 %v682, 88
        %v705 = vpop.permute.xlu0 %704
        %706 = vrot.lane.b32.xlu0 %v683, 88
        %v707 = vpop.permute.xlu0 %706
        %vm716 = vcmask 786112
        %717 = vst.msk [vmem:[#allocation2] sm:$0xff] %vm716, %v693
        %718 = vst.msk [vmem:[#allocation2 + $0x8] sm:$0xff] %vm716, %v695
        %719 = vst.msk [vmem:[#allocation2 + $0x10] sm:$0xff] %vm716, %v697
        %720 = vst.msk [vmem:[#allocation2 + $0x18] sm:$0xff] %vm716, %v699
        %721 = vst.msk [vmem:[#allocation2 + $0x20] sm:$0xff] %vm716, %v701
        %722 = vst.msk [vmem:[#allocation2 + $0x28] sm:$0xff] %vm716, %v703
        %723 = vst.msk [vmem:[#allocation2 + $0x30] sm:$0xff] %vm716, %v705
        %724 = vst.msk [vmem:[#allocation2 + $0x38] sm:$0xff] %vm716, %v707
        %s725 = scalar_lea.vmem %s161, 304
        %v726 = vld [vmem:[%s725] sm:$0xff]
        %v727 = vld [vmem:[%s725 + $0x10] sm:$0xff]
        %v728 = vld [vmem:[%s725 + $0x20] sm:$0xff]
        %v729 = vld [vmem:[%s725 + $0x30] sm:$0xff]
        %v730 = vld [vmem:[%s725 + $0x40] sm:$0xff]
        %v731 = vld [vmem:[%s725 + $0x50] sm:$0xff]
        %v732 = vld [vmem:[%s725 + $0x60] sm:$0xff]
        %v733 = vld [vmem:[%s725 + $0x70] sm:$0xff]
        %742 = vrot.lane.b32.xlu0 %v726, 96
        %v743 = vpop.permute.xlu0 %742
        %744 = vrot.lane.b32.xlu0 %v727, 96
        %v745 = vpop.permute.xlu0 %744
        %746 = vrot.lane.b32.xlu0 %v728, 96
        %v747 = vpop.permute.xlu0 %746
        %748 = vrot.lane.b32.xlu0 %v729, 96
        %v749 = vpop.permute.xlu0 %748
        %750 = vrot.lane.b32.xlu0 %v730, 96
        %v751 = vpop.permute.xlu0 %750
        %752 = vrot.lane.b32.xlu0 %v731, 96
        %v753 = vpop.permute.xlu0 %752
        %754 = vrot.lane.b32.xlu0 %v732, 96
        %v755 = vpop.permute.xlu0 %754
        %756 = vrot.lane.b32.xlu0 %v733, 96
        %v757 = vpop.permute.xlu0 %756
        %vm766 = vcmask 851712
        %767 = vst.msk [vmem:[#allocation2] sm:$0xff] %vm766, %v743
        %768 = vst.msk [vmem:[#allocation2 + $0x8] sm:$0xff] %vm766, %v745
        %769 = vst.msk [vmem:[#allocation2 + $0x10] sm:$0xff] %vm766, %v747
        %770 = vst.msk [vmem:[#allocation2 + $0x18] sm:$0xff] %vm766, %v749
        %771 = vst.msk [vmem:[#allocation2 + $0x20] sm:$0xff] %vm766, %v751
        %772 = vst.msk [vmem:[#allocation2 + $0x28] sm:$0xff] %vm766, %v753
        %773 = vst.msk [vmem:[#allocation2 + $0x30] sm:$0xff] %vm766, %v755
        %774 = vst.msk [vmem:[#allocation2 + $0x38] sm:$0xff] %vm766, %v757
        %s775 = scalar_lea.vmem %s161, 448
        %v776 = vld [vmem:[%s775] sm:$0xff]
        %v777 = vld [vmem:[%s775 + $0x10] sm:$0xff]
        %v778 = vld [vmem:[%s775 + $0x20] sm:$0xff]
        %v779 = vld [vmem:[%s775 + $0x30] sm:$0xff]
        %v780 = vld [vmem:[%s775 + $0x40] sm:$0xff]
        %v781 = vld [vmem:[%s775 + $0x50] sm:$0xff]
        %v782 = vld [vmem:[%s775 + $0x60] sm:$0xff]
        %v783 = vld [vmem:[%s775 + $0x70] sm:$0xff]
        %792 = vrot.lane.b32.xlu0 %v776, 104
        %v793 = vpop.permute.xlu0 %792
        %794 = vrot.lane.b32.xlu0 %v777, 104
        %v795 = vpop.permute.xlu0 %794
        %796 = vrot.lane.b32.xlu0 %v778, 104
        %v797 = vpop.permute.xlu0 %796
        %798 = vrot.lane.b32.xlu0 %v779, 104
        %v799 = vpop.permute.xlu0 %798
        %800 = vrot.lane.b32.xlu0 %v780, 104
        %v801 = vpop.permute.xlu0 %800
        %802 = vrot.lane.b32.xlu0 %v781, 104
        %v803 = vpop.permute.xlu0 %802
        %804 = vrot.lane.b32.xlu0 %v782, 104
        %v805 = vpop.permute.xlu0 %804
        %806 = vrot.lane.b32.xlu0 %v783, 104
        %v807 = vpop.permute.xlu0 %806
        %vm816 = vcmask 917312
        %817 = vst.msk [vmem:[#allocation2] sm:$0xff] %vm816, %v793
        %818 = vst.msk [vmem:[#allocation2 + $0x8] sm:$0xff] %vm816, %v795
        %819 = vst.msk [vmem:[#allocation2 + $0x10] sm:$0xff] %vm816, %v797
        %820 = vst.msk [vmem:[#allocation2 + $0x18] sm:$0xff] %vm816, %v799
        %821 = vst.msk [vmem:[#allocation2 + $0x20] sm:$0xff] %vm816, %v801
        %822 = vst.msk [vmem:[#allocation2 + $0x28] sm:$0xff] %vm816, %v803
        %823 = vst.msk [vmem:[#allocation2 + $0x30] sm:$0xff] %vm816, %v805
        %824 = vst.msk [vmem:[#allocation2 + $0x38] sm:$0xff] %vm816, %v807
        %v825 = vld [vmem:[%s725 + $0x1] sm:$0xff]
        %v826 = vld [vmem:[%s725 + $0x11] sm:$0xff]
        %v827 = vld [vmem:[%s725 + $0x21] sm:$0xff]
        %v828 = vld [vmem:[%s725 + $0x31] sm:$0xff]
        %v829 = vld [vmem:[%s725 + $0x41] sm:$0xff]
        %v830 = vld [vmem:[%s725 + $0x51] sm:$0xff]
        %v831 = vld [vmem:[%s725 + $0x61] sm:$0xff]
        %v832 = vld [vmem:[%s725 + $0x71] sm:$0xff]
        %841 = vrot.lane.b32.xlu0 %v825, 112
        %v842 = vpop.permute.xlu0 %841
        %843 = vrot.lane.b32.xlu0 %v826, 112
        %v844 = vpop.permute.xlu0 %843
        %845 = vrot.lane.b32.xlu0 %v827, 112
        %v846 = vpop.permute.xlu0 %845
        %847 = vrot.lane.b32.xlu0 %v828, 112
        %v848 = vpop.permute.xlu0 %847
        %849 = vrot.lane.b32.xlu0 %v829, 112
        %v850 = vpop.permute.xlu0 %849
        %851 = vrot.lane.b32.xlu0 %v830, 112
        %v852 = vpop.permute.xlu0 %851
        %853 = vrot.lane.b32.xlu0 %v831, 112
        %v854 = vpop.permute.xlu0 %853
        %855 = vrot.lane.b32.xlu0 %v832, 112
        %v856 = vpop.permute.xlu0 %855
        %vm865 = vcmask 982912
        %866 = vst.msk [vmem:[#allocation2] sm:$0xff] %vm865, %v842
        %867 = vst.msk [vmem:[#allocation2 + $0x8] sm:$0xff] %vm865, %v844
        %868 = vst.msk [vmem:[#allocation2 + $0x10] sm:$0xff] %vm865, %v846
        %869 = vst.msk [vmem:[#allocation2 + $0x18] sm:$0xff] %vm865, %v848
        %870 = vst.msk [vmem:[#allocation2 + $0x20] sm:$0xff] %vm865, %v850
        %871 = vst.msk [vmem:[#allocation2 + $0x28] sm:$0xff] %vm865, %v852
        %872 = vst.msk [vmem:[#allocation2 + $0x30] sm:$0xff] %vm865, %v854
        %873 = vst.msk [vmem:[#allocation2 + $0x38] sm:$0xff] %vm865, %v856
        %v874 = vld [vmem:[%s775 + $0x1] sm:$0xff]
        %v875 = vld [vmem:[%s775 + $0x11] sm:$0xff]
        %v876 = vld [vmem:[%s775 + $0x21] sm:$0xff]
        %v877 = vld [vmem:[%s775 + $0x31] sm:$0xff]
        %v878 = vld [vmem:[%s775 + $0x41] sm:$0xff]
        %v879 = vld [vmem:[%s775 + $0x51] sm:$0xff]
        %v880 = vld [vmem:[%s775 + $0x61] sm:$0xff]
        %v881 = vld [vmem:[%s775 + $0x71] sm:$0xff]
        %890 = vrot.lane.b32.xlu0 %v874, 120
        %v891 = vpop.permute.xlu0 %890
        %892 = vrot.lane.b32.xlu0 %v875, 120
        %v893 = vpop.permute.xlu0 %892
        %894 = vrot.lane.b32.xlu0 %v876, 120
        %v895 = vpop.permute.xlu0 %894
        %896 = vrot.lane.b32.xlu0 %v877, 120
        %v897 = vpop.permute.xlu0 %896
        %898 = vrot.lane.b32.xlu0 %v878, 120
        %v899 = vpop.permute.xlu0 %898
        %900 = vrot.lane.b32.xlu0 %v879, 120
        %v901 = vpop.permute.xlu0 %900
        %902 = vrot.lane.b32.xlu0 %v880, 120
        %v903 = vpop.permute.xlu0 %902
        %904 = vrot.lane.b32.xlu0 %v881, 120
        %v905 = vpop.permute.xlu0 %904
        %vm914 = vcmask 1048512
        %915 = vst.msk [vmem:[#allocation2] sm:$0xff] %vm914, %v891
        %916 = vst.msk [vmem:[#allocation2 + $0x8] sm:$0xff] %vm914, %v893
        %917 = vst.msk [vmem:[#allocation2 + $0x10] sm:$0xff] %vm914, %v895
        %918 = vst.msk [vmem:[#allocation2 + $0x18] sm:$0xff] %vm914, %v897
        %919 = vst.msk [vmem:[#allocation2 + $0x20] sm:$0xff] %vm914, %v899
        %920 = vst.msk [vmem:[#allocation2 + $0x28] sm:$0xff] %vm914, %v901
        %921 = vst.msk [vmem:[#allocation2 + $0x30] sm:$0xff] %vm914, %v903
        %922 = vst.msk [vmem:[#allocation2 + $0x38] sm:$0xff] %vm914, %v905
        %v923 = vld [vmem:[#allocation2] sm:$0xff]
        %v924 = vld [vmem:[#allocation2 + $0x8] sm:$0xff]
        %v925 = vld [vmem:[#allocation2 + $0x10] sm:$0xff]
        %v926 = vld [vmem:[#allocation2 + $0x18] sm:$0xff]
        %v927 = vld [vmem:[#allocation2 + $0x20] sm:$0xff]
        %v928 = vld [vmem:[#allocation2 + $0x28] sm:$0xff]
        %v929 = vld [vmem:[#allocation2 + $0x30] sm:$0xff]
        %v930 = vld [vmem:[#allocation2 + $0x38] sm:$0xff]
        %v931 = vld [vmem:[%s1] sm:$0xff]
        %v932 = vld [vmem:[%s1 + $0x8] sm:$0xff]
        %v933 = vld [vmem:[%s1 + $0x10] sm:$0xff]
        %v934 = vld [vmem:[%s1 + $0x18] sm:$0xff]
        %v935 = vld [vmem:[%s1 + $0x20] sm:$0xff]
        %v936 = vld [vmem:[%s1 + $0x28] sm:$0xff]
        %v937 = vld [vmem:[%s1 + $0x30] sm:$0xff]
        %v938 = vld [vmem:[%s1 + $0x38] sm:$0xff]
        %v939 = vld [vmem:[%s1 + $0x40] sm:$0xff]
        %v940 = vld [vmem:[%s1 + $0x48] sm:$0xff]
        %v941 = vld [vmem:[%s1 + $0x50] sm:$0xff]
        %v942 = vld [vmem:[%s1 + $0x58] sm:$0xff]
        %v943 = vld [vmem:[%s1 + $0x60] sm:$0xff]
        %v944 = vld [vmem:[%s1 + $0x68] sm:$0xff]
        %v945 = vld [vmem:[%s1 + $0x70] sm:$0xff]
        %v946 = vld [vmem:[%s1 + $0x78] sm:$0xff]
        %947 = vmatprep.subr.mxu0 0.0
        %948 = vmatpush1.msra.mxu0 %v946
        %949 = vmatprep.subr.mxu0 0.0
        %950 = vmatpush1.msra.mxu0 %v945
        %951 = vmatprep.subr.mxu0 0.0
        %952 = vmatpush1.msra.mxu0 %v944
        %953 = vmatprep.subr.mxu0 0.0
        %954 = vmatpush1.msra.mxu0 %v943
        %955 = vmatprep.subr.mxu0 0.0
        %956 = vmatpush1.msra.mxu0 %v942
        %957 = vmatprep.subr.mxu0 0.0
        %958 = vmatpush1.msra.mxu0 %v941
        %959 = vmatprep.subr.mxu0 0.0
        %960 = vmatpush1.msra.mxu0 %v940
        %961 = vmatprep.subr.mxu0 0.0
        %962 = vmatpush1.msra.mxu0 %v939
        %963 = vmatprep.subr.mxu0 0.0
        %964 = vmatpush1.msra.mxu0 %v938
        %965 = vmatprep.subr.mxu0 0.0
        %966 = vmatpush1.msra.mxu0 %v937
        %967 = vmatprep.subr.mxu0 0.0
        %968 = vmatpush1.msra.mxu0 %v936
        %969 = vmatprep.subr.mxu0 0.0
        %970 = vmatpush1.msra.mxu0 %v935
        %971 = vmatprep.subr.mxu0 0.0
        %972 = vmatpush1.msra.mxu0 %v934
        %973 = vmatprep.subr.mxu0 0.0
        %974 = vmatpush1.msra.mxu0 %v933
        %975 = vmatprep.subr.mxu0 0.0
        %976 = vmatpush1.msra.mxu0 %v932
        %977 = vmatprep.subr.mxu0 0.0
        %978 = vmatpush1.msra.mxu0 %v931
        %979 = vmatprep.subr.mxu0 0.0
        %980 = vmatpush2.msra.mxu0 0.0
        %981 = vmatprep.subr.mxu0 0.0
        %982 = vmatpush2.msra.mxu0 0.0
        %983 = vmatprep.subr.mxu0 0.0
        %984 = vmatpush2.msra.mxu0 0.0
        %985 = vmatprep.subr.mxu0 0.0
        %986 = vmatpush2.msra.mxu0 0.0
        %987 = vmatprep.subr.mxu0 0.0
        %988 = vmatpush2.msra.mxu0 0.0
        %989 = vmatprep.subr.mxu0 0.0
        %990 = vmatpush2.msra.mxu0 0.0
        %991 = vmatprep.subr.mxu0 0.0
        %992 = vmatpush2.msra.mxu0 0.0
        %993 = vmatprep.subr.mxu0 0.0
        %994 = vmatpush2.msra.mxu0 0.0
        %995 = vmatprep.subr.mxu0 0.0
        %996 = vmatpush2.msra.mxu0 0.0
        %997 = vmatprep.subr.mxu0 0.0
        %998 = vmatpush2.msra.mxu0 0.0
        %999 = vmatprep.subr.mxu0 0.0
        %1000 = vmatpush2.msra.mxu0 0.0
        %1001 = vmatprep.subr.mxu0 0.0
        %1002 = vmatpush2.msra.mxu0 0.0
        %1003 = vmatprep.subr.mxu0 0.0
        %1004 = vmatpush2.msra.mxu0 0.0
        %1005 = vmatprep.subr.mxu0 0.0
        %1006 = vmatpush2.msra.mxu0 0.0
        %1007 = vmatprep.subr.mxu0 0.0
        %1008 = vmatpush2.msra.mxu0 0.0
        %1009 = vmatprep.subr.mxu0 0.0
        %1010 = vmatpush2.msra.mxu0 0.0
        %1011 = vmatprep.mubr.f32.mxu0 0.0
        %1012 = vmatmul.mubr.f32.gmra.mxu0 %v923
        %v1013 = vpop.f32.mrf.mxu0
        %v1014 = vadd.f32 0.0, %v1013
        %v1015 = vpop.f32.mrf.mxu0
        %1016 = vmatprep.mubr.f32.mxu0 0.0
        %1017 = vmatmul.mubr.f32.gmra.mxu0 %v924
        %v1018 = vpop.f32.mrf.mxu0
        %v1019 = vadd.f32 0.0, %v1018
        %v1020 = vpop.f32.mrf.mxu0
        %1021 = vmatprep.mubr.f32.mxu0 0.0
        %1022 = vmatmul.mubr.f32.gmra.mxu0 %v925
        %v1023 = vpop.f32.mrf.mxu0
        %v1024 = vadd.f32 0.0, %v1023
        %v1025 = vpop.f32.mrf.mxu0
        %1026 = vmatprep.mubr.f32.mxu0 0.0
        %1027 = vmatmul.mubr.f32.gmra.mxu0 %v926
        %v1028 = vpop.f32.mrf.mxu0
        %v1029 = vadd.f32 0.0, %v1028
        %v1030 = vpop.f32.mrf.mxu0
        %1031 = vmatprep.mubr.f32.mxu0 0.0
        %1032 = vmatmul.mubr.f32.gmra.mxu0 %v927
        %v1033 = vpop.f32.mrf.mxu0
        %v1034 = vadd.f32 0.0, %v1033
        %v1035 = vpop.f32.mrf.mxu0
        %1036 = vmatprep.mubr.f32.mxu0 0.0
        %1037 = vmatmul.mubr.f32.gmra.mxu0 %v928
        %v1038 = vpop.f32.mrf.mxu0
        %v1039 = vadd.f32 0.0, %v1038
        %v1040 = vpop.f32.mrf.mxu0
        %1041 = vmatprep.mubr.f32.mxu0 0.0
        %1042 = vmatmul.mubr.f32.gmra.mxu0 %v929
        %v1043 = vpop.f32.mrf.mxu0
        %v1044 = vadd.f32 0.0, %v1043
        %v1045 = vpop.f32.mrf.mxu0
        %1046 = vmatprep.mubr.f32.mxu0 0.0
        %1047 = vmatmul.mubr.f32.gmra.mxu0 %v930
        %v1048 = vpop.f32.mrf.mxu0
        %v1049 = vadd.f32 0.0, %v1048
        %v1050 = vpop.f32.mrf.mxu0
        %1051 = vdwg.mxu0
        %vm1052 = vcmask 130048
        %1053 = vst.msk [vmem:[%s155] sm:$0xff] %vm1052, %v1014
        %1054 = vst.msk [vmem:[%s155 + $0x8] sm:$0xff] %vm1052, %v1019
        %1055 = vst.msk [vmem:[%s155 + $0x10] sm:$0xff] %vm1052, %v1024
        %1056 = vst.msk [vmem:[%s155 + $0x18] sm:$0xff] %vm1052, %v1029
        %1057 = vst.msk [vmem:[%s155 + $0x20] sm:$0xff] %vm1052, %v1034
        %1058 = vst.msk [vmem:[%s155 + $0x28] sm:$0xff] %vm1052, %v1039
        %1059 = vst.msk [vmem:[%s155 + $0x30] sm:$0xff] %vm1052, %v1044
        %1060 = vst.msk [vmem:[%s155 + $0x38] sm:$0xff] %vm1052, %v1049
        %s1061 = sand.u32 %s87, 1
        %s1062 = scalar_lea.sflag [#allocation4], %s1061
        %s1063 = sand.u32 %s87, 1
        %s1064 = smul.addr %s1063, 64
        %s1065 = scalar_lea.vmem [#allocation3], %s1064
        // Predicated region
        $region29: #{downsample_forward.1} parent=27 // pred_check
          %p1066 = pneg %p97
        $region30: #{downsample_forward.1} parent=27 // pred_check_branch
          %1068 = sbr.rel (%p1066) target = $region32
        $region31: #{downsample_forward.1} parent=27 // pred_region
          %s1069 = smul.u32 8, %s21
          %s1071 = ssub.s32 1024, 1024
          %1072 = vsyncadd %s1062, %s1071
          %s1073 = smul.addr %s20, 8
          %s1074 = sadd.s32 %s1069, %s1073
          %s1075 = smul.addr %s1074, 128
          %s1076 = scalar_lea.hbm %s2, %s1075
          %s1077 = sshll.u32 %s1065, 4
          %s1078 = int_to_ptr.vmem [resolvable:$true] %s1077
          %1083 = dma.vmem_to_hbm [thread:$0]  %s1078, 1024, %s1076, %s1062, 128, 128, 8
        $region32: #{downsample_forward.1} parent=27 // pred_fallthru
          _
      $region28: #{downsample_forward.1} parent=5 // pred_fallthru
        _
      %p1084 = scmp.le.s32.totalorder 2, %s11
      // Predicated region
      $region33: #{downsample_forward.1} parent=5 // pred_check
        %p1085 = pneg %p1084
      $region34: #{downsample_forward.1} parent=5 // pred_check_branch
        %1087 = sbr.rel (%p1085) target = $region36
      $region35: #{downsample_forward.1} parent=5 // pred_region
        %s1088 = ssub.s32 %s11, 2
        // Predicated region
        $region37: #{downsample_forward.1} parent=35 // pred_check
          %p1089 = pneg %p103
        $region38: #{downsample_forward.1} parent=35 // pred_check_branch
          %1091 = sbr.rel (%p1089) target = $region40
        $region39: #{downsample_forward.1} parent=35 // pred_region
          %s1092 = sand.u32 %s88, 1
          %s1093 = scalar_lea.sflag [#allocation4], %s1092
          %s1094 = sand.u32 %s88, 1
          %s1095 = smul.addr %s1094, 64
          %s1096 = scalar_lea.vmem [#allocation3], %s1095
          %1097 = dma.done %s1093, 1024
        $region40: #{downsample_forward.1} parent=35 // pred_fallthru
          _
      $region36: #{downsample_forward.1} parent=5 // pred_fallthru
        _
    $region6: #{downsample_forward.1} parent=1 // loop_footer
      %s15 = sadd.s32 1, %s11
    $region7: #{downsample_forward.1} parent=1 // loop_footer_branch
      %10 = sbr.rel target = $region3
    $region8: #{downsample_forward.1} parent=1 // loop_exit
      _
    %1098 = vsyncpa [#allocation4], 1
    %s1099 = scalar_lea.sflag [#allocation4], 1
    %1100 = vsyncpa %s1099, 1

</llo_original>
